<compile_context>
chip_gen: v7x
topology: tpu7x:2x2x1
jax: 0.10.0
libtpu: 0.0.40
codegen_flags: <defaults>
</compile_context>

<pallas_src>
import numpy as np
import jax
import jax.numpy as jnp
from jax.experimental import pallas as pl
from jax.experimental.pallas import tpu as pltpu


def _pool_kernel(pm_ref, x_ref, o_ref):
    # pm_ref: (OH*OW, H*W) static pooling weights (same block for every step)
    # x_ref : (1, H*W, TC) input tile, native dtype
    # o_ref : (1, OH*OW, TC) output tile
    out = jnp.dot(pm_ref[...], x_ref[0], preferred_element_type=jnp.float32)
    o_ref[0] = out.astype(o_ref.dtype)


def _build_pool_matrix(H, W, W_pad, OH, OW, sh, sw, kh, kw, dtype):
    """Static (OH*OW, H*W) weight matrix.

    Weight = 1/(kh*kw) where the (oh, ow) window covers a REAL pixel (iw < W);
    padded columns are simply absent (their value would be 0 anyway), but the
    divisor keeps counting them, matching the PyTorch module.
    """
    inv_area = 1.0 / float(kh * kw)
    pm = np.zeros((OH * OW, H * W), dtype=np.float32)
    for oh in range(OH):
        for ow in range(OW):
            r = oh * OW + ow
            for ih in range(oh * sh, oh * sh + kh):
                for iw in range(ow * sw, ow * sw + kw):
                    if iw < W:                      # skip (zero-valued) pad cols
                        pm[r, ih * W + iw] = inv_area
    return jnp.asarray(pm, dtype=dtype)


def _choose_c_tile(C, HW, OHOW, itemsize):
    """Largest multiple-of-128 divisor of C whose double-buffered blocks stay
    well under v7x's VMEM; fall back to full C when C isn't 128-aligned."""
    if C % 128 != 0:
        return C
    budget = 40 * 1024 * 1024
    for d in sorted((d for d in range(128, C + 1, 128) if C % d == 0),
                    reverse=True):
        if 2 * d * (HW + OHOW) * itemsize <= budget:
            return d
    return 128


def adaptive_avg_pool2d_custom(x, output_size):
    """JAX/Pallas equivalent of AdaptiveAvgPool2dCustom.forward.

    Args:
        x: (B, C, H, W) array (NCHW, like PyTorch).
        output_size: length-2 sequence (OH, OW).
    Returns:
        (B, C, OH, OW) array of x.dtype.
    """
    output_size = np.array(output_size)
    B, C, H, W = x.shape
    OH, OW = int(output_size[0]), int(output_size[1])

    # Conceptual right-padding of W (folded into the pooling matrix, no copy).
    W_pad = max(W, OW)

    in_hw = np.array([H, W_pad])
    stride = np.floor(in_hw / output_size).astype(np.int32)
    kernel = in_hw - (output_size - 1) * stride
    sh, sw = int(stride[0]), int(stride[1])
    kh, kw = int(kernel[0]), int(kernel[1])
    assert sh >= 1 and sw >= 1, (
        "AdaptiveAvgPool2dCustom: input spatial dims must be >= output_size "
        "(same latent restriction as the PyTorch original).")

    HW = H * W
    OHOW = OH * OW

    # MXU prefers matching operand dtypes; 1/(kh*kw) in f32 for f32 inputs.
    pm_dtype = jnp.float32 if x.dtype == jnp.float32 else x.dtype
    pool_mat = _build_pool_matrix(H, W, W_pad, OH, OW, sh, sw, kh, kw, pm_dtype)

    itemsize = np.dtype(x.dtype).itemsize
    TC = _choose_c_tile(C, HW, OHOW, itemsize)

    # Channels-last, lane-dense view: (B, H*W, C).
    x_cl = jnp.transpose(x, (0, 2, 3, 1)).reshape(B, HW, C)

    per_step = (HW * TC + OHOW * TC) * itemsize \
        + OHOW * HW * np.dtype(pm_dtype).itemsize
    vmem_limit = int(min(100 * 1024 * 1024,
                         max(32 * 1024 * 1024, 4 * per_step + (2 << 20))))

    out_cl = pl.pallas_call(
        _pool_kernel,
        out_shape=jax.ShapeDtypeStruct((B, OHOW, C), x.dtype),
        grid_spec=pltpu.PrefetchScalarGridSpec(
            num_scalar_prefetch=0,
            grid=(B, C // TC),
            in_specs=[
                pl.BlockSpec((OHOW, HW), lambda b, c: (0, 0)),      # pool weights
                pl.BlockSpec((1, HW, TC), lambda b, c: (b, 0, c)),  # input tile
            ],
            out_specs=pl.BlockSpec((1, OHOW, TC), lambda b, c: (b, 0, c)),
        ),
        compiler_params=pltpu.CompilerParams(
            dimension_semantics=("parallel", "parallel"),
            vmem_limit_bytes=vmem_limit),
    )(pool_mat, x_cl)

    # Back to NCHW.
    return jnp.transpose(out_cl.reshape(B, OH, OW, C), (0, 3, 1, 2))


def _reference(x, output_size):
    """Plain-JAX reference mirroring the PyTorch semantics exactly."""
    output_size = np.array(output_size)
    B, C, H, W = x.shape
    if W < int(output_size[-1]):
        pad_w = int(output_size[-1]) - W
        x = jnp.concatenate(
            [x, jnp.zeros((B, C, H, pad_w), dtype=x.dtype)], axis=-1)
        W = W + pad_w
    in_hw = np.array([H, W])
    stride = np.floor(in_hw / output_size).astype(np.int32)
    kernel = in_hw - (output_size - 1) * stride
    sh, sw = int(stride[0]), int(stride[1])
    kh, kw = int(kernel[0]), int(kernel[1])
    OH, OW = int(output_size[0]), int(output_size[1])
    out = jnp.zeros((B, C, OH, OW), dtype=jnp.float32)
    for oh in range(OH):
        for ow in range(OW):
            win = x[:, :, oh * sh: oh * sh + kh, ow * sw: ow * sw + kw]
            out = out.at[:, :, oh, ow].set(
                jnp.mean(win.astype(jnp.float32), axis=(2, 3)))
    return out.astype(x.dtype)


if __name__ == "__main__":
    key = jax.random.PRNGKey(0)

    # Case 1: regular pooling, no width padding.
    B, C, H, W = 2, 4, 16, 16
    output_size = (1, 4)
    x = jax.random.normal(key, (B, C, H, W), dtype=jnp.float32)
    y = jax.block_until_ready(adaptive_avg_pool2d_custom(x, output_size))
    y_ref = _reference(x, output_size)
    assert y.shape == (B, C, output_size[0], output_size[1])
    assert jnp.allclose(y, y_ref, atol=1e-5, rtol=1e-5)

    # Case 2: W < output width -> exercises the zero-pad-in-the-weights path.
    x2 = jax.random.normal(jax.random.PRNGKey(1), (B, C, H, 2),
                           dtype=jnp.float32)
    y2 = jax.block_until_ready(adaptive_avg_pool2d_custom(x2, output_size))
    y2_ref = _reference(x2, output_size)
    assert y2.shape == (B, C, output_size[0], output_size[1])
    assert jnp.allclose(y2, y2_ref, atol=1e-5, rtol=1e-5)

    print("KERNEL_OK")
</pallas_src>

<mosaic_0001>
module attributes {stable_mosaic.version = 11 : i64} {
  func.func @_pool_kernel(%arg0: i32, %arg1: i32, %arg2: memref<4x256xf32, #tpu.memory_space<vmem>>, %arg3: memref<1x256x4xf32, #tpu.memory_space<vmem>>, %arg4: memref<1x4x4xf32, #tpu.memory_space<vmem>>) attributes {dimension_semantics = [#tpu.dimension_semantics<parallel>, #tpu.dimension_semantics<parallel>], iteration_bounds = array<i64: 2, 1>, scalar_prefetch = 0 : i64, scratch_operands = 0 : i64, tpu.core_type = #tpu.core_type<tc>, window_params = [{pipeline_mode = #tpu.pipeline_mode<synchronous>, transform_indices = @transform_0, window_bounds = array<i64: 4, 256>}, {transform_indices = @transform_1, window_bounds = array<i64: 1, 256, 4>}, {transform_indices = @transform_2, window_bounds = array<i64: 1, 4, 4>}]} {
    %c0 = arith.constant 0 : index
    %c0_0 = arith.constant 0 : index
    %0 = vector.load %arg2[%c0, %c0_0] : memref<4x256xf32, #tpu.memory_space<vmem>>, vector<4x256xf32>
    %c0_1 = arith.constant 0 : index
    %c0_2 = arith.constant 0 : index
    %c0_3 = arith.constant 0 : index
    %1 = vector.load %arg3[%c0_1, %c0_2, %c0_3] : memref<1x256x4xf32, #tpu.memory_space<vmem>>, vector<1x256x4xf32>
    %2 = vector.shape_cast %1 : vector<1x256x4xf32> to vector<256x4xf32>
    %cst = arith.constant dense<0.000000e+00> : vector<4x4xf32>
    %3 = tpu.matmul %0, %2, %cst {dimension_numbers = #tpu.dot_dimension_numbers<[1], [0], [0], [1], [0, 0, 1, 1], [], []>} : vector<4x256xf32>, vector<256x4xf32>, vector<4x4xf32> -> vector<4x4xf32>
    %c0_4 = arith.constant 0 : index
    %c0_5 = arith.constant 0 : index
    %c0_6 = arith.constant 0 : index
    %4 = vector.load %arg4[%c0_4, %c0_5, %c0_6] : memref<1x4x4xf32, #tpu.memory_space<vmem>>, vector<1x4x4xf32>
    %5 = vector.shape_cast %4 : vector<1x4x4xf32> to vector<4x4xf32>
    %6 = vector.shape_cast %3 : vector<4x4xf32> to vector<1x4x4xf32>
    tpu.vector_store %arg4[%c0_4, %c0_5, %c0_6], %6 {strides = array<i32>} : memref<1x4x4xf32, #tpu.memory_space<vmem>>, vector<1x4x4xf32>,
    return
  }
  func.func @transform_0(%arg0: i32, %arg1: i32) -> (i32, i32) {
    %c0_i32 = arith.constant 0 : i32
    %c0_i32_0 = arith.constant 0 : i32
    %c0_i32_1 = arith.constant 0 : i32
    return %c0_i32, %c0_i32_0 : i32, i32
  }
  func.func @transform_1(%arg0: i32, %arg1: i32) -> (i32, i32, i32) {
    %c0_i32 = arith.constant 0 : i32
    %c0_i32_0 = arith.constant 0 : i32
    return %arg0, %c0_i32, %arg1 : i32, i32, i32
  }
  func.func @transform_2(%arg0: i32, %arg1: i32) -> (i32, i32, i32) {
    %c0_i32 = arith.constant 0 : i32
    %c0_i32_0 = arith.constant 0 : i32
    return %arg0, %c0_i32, %arg1 : i32, i32, i32
  }
}

</mosaic_0001>

<llo_original>
// kernel: tpu_custom_call.1
$region0: #{tpu_custom_call.1}
  #allocation0 [shape = 'u32[]', space=smem, size = 0x4, offset = 0x4, fixed_abs, tag = 'smem constant byte address 0x4 - core index']
  #allocation1 [shape = 'u32[144,128]{1,0:T(1,128)}', space=vmem, size = 0x12000, scoped, tag = 'internal scratch']
  %s0 = inlined_call_operand.vmem [shape: f32[4,256], index: 0, kind: input, shape index: {}]
  %s1 = inlined_call_operand.vmem [shape: f32[2,256,4], index: 1, kind: input, shape index: {}]
  %s2 = inlined_call_operand.hbm [shape: f32[2,4,4], index: 2, kind: output, shape index: {}]
  %s3 = sld [smem:[#allocation0]]
  $region41: #{tpu_custom_call.1} parent=0
    _
  %s5 = ssub.s32 1, %s3
  %s6 = scalar_select 0, %s5, %s3
  $region1: #{tpu_custom_call.1} parent=0
    #allocation2 [shape = 'u8[4096]{0}', space=vmem, size = 0x1000, scoped, tag = 'output window, operand 0']
    #allocation3 [shape = 's32[2]{0}', space=sflag, size = 0x8, scoped, tag = 'scoped memory for tpu_custom_call.1']
    %7 = vsyncpa [#allocation3], 0
    %s8 = scalar_lea.sflag [#allocation3], 1
    %9 = vsyncpa %s8, 0
    loop: start=0, step=1, limit=4
    $region2: #{tpu_custom_call.1} parent=1 // loop_pre_header
      _
    $region3: #{tpu_custom_call.1} parent=1 // loop_header
      %s11 = sphi 0, %s15
      %p12 = scmp.ge.s32.totalorder %s11, 4
      %s18 = sphi 0, %s30
      %s19 = sphi 0, %s26
      %s20 = sphi 0, %s18
      %s21 = sphi 0, %s19
      %s22 = sphi 0, %s20
      %s23 = sphi 0, %s21
      %s31 = sphi 0, %s31
      %s33 = sphi 0, %s31
      %s34 = sphi 0, %s33
      %s48 = sphi 0, %s34
      %s56 = sphi 0, %s58
      %s59 = sphi 0, %s56
      %s60 = sphi 0, %s59
      %s76 = sphi 0, %s60
      %s84 = sphi 0, %s86
      %s87 = sphi 0, %s84
      %s88 = sphi 0, %s87
      %s104 = sphi 0, %s88
    $region4: #{tpu_custom_call.1} parent=1 // loop_header_branch
      %14 = sbr.rel (%p12) target = $region8
    $region5: #{tpu_custom_call.1} parent=1 // loop_body
      %s16 = ssub.s32 %s11, 1
      %s17 = ssub.s32 %s11, 2
      %s24 = sadd.s32 1, %s19
      %p25 = scmp.ge.s32.totalorder %s24, 1
      %s26 = scalar_select %p25, 0, %s24
      %s27 = sadd.s32 1, %s18
      %s28 = scalar_select %p25, %s27, %s18
      %p29 = scmp.ge.s32.totalorder %s28, 2
      %s30 = scalar_select %p29, 0, %s28
      %s32 = sadd.s32 %s31, 1
      %p35 = scmp.eq.s32.totalorder %s11, 1
      %p36 = scmp.ne.s32.totalorder %s31, %s33
      %p37 = scmp.eq.s32.totalorder %s11, 0
      %p38 = por %p36, %p37
      %p39 = scmp.ne.s32.totalorder %s31, %s33
      %p40 = scmp.eq.s32.totalorder %s16, 1
      %p41 = por %p39, %p40
      %p42 = scmp.ne.s32.totalorder %s33, %s34
      %p43 = scmp.eq.s32.totalorder %s16, 0
      %p44 = por %p42, %p43
      %p45 = scmp.ne.s32.totalorder %s33, %s34
      %p46 = scmp.eq.s32.totalorder %s17, 1
      %p47 = por %p45, %p46
      %p49 = scmp.ne.s32.totalorder %s34, %s48
      %p50 = scmp.eq.s32.totalorder %s17, 0
      %p51 = por %p49, %p50
      %s52 = ssub.s32 %s18, %s30
      %s53 = ssub.s32 %s19, %s26
      %s54 = sor.u32 %s52, %s53
      %p55 = scmp.eq.s32.totalorder %s54, 0
      %s57 = sadd.s32 %s56, 1
      %s58 = scalar_select %p55, %s56, %s57
      %p61 = pneg %p55
      %p62 = scmp.eq.s32.totalorder %s11, 1
      %p63 = por %p61, %p62
      %p64 = scmp.ne.s32.totalorder %s56, %s59
      %p65 = scmp.eq.s32.totalorder %s11, 0
      %p66 = por %p64, %p65
      %p67 = scmp.ne.s32.totalorder %s56, %s59
      %p68 = scmp.eq.s32.totalorder %s16, 1
      %p69 = por %p67, %p68
      %p70 = scmp.ne.s32.totalorder %s59, %s60
      %p71 = scmp.eq.s32.totalorder %s16, 0
      %p72 = por %p70, %p71
      %p73 = scmp.ne.s32.totalorder %s59, %s60
      %p74 = scmp.eq.s32.totalorder %s17, 1
      %p75 = por %p73, %p74
      %p77 = scmp.ne.s32.totalorder %s60, %s76
      %p78 = scmp.eq.s32.totalorder %s17, 0
      %p79 = por %p77, %p78
      %s80 = ssub.s32 %s18, %s30
      %s81 = ssub.s32 %s19, %s26
      %s82 = sor.u32 %s80, %s81
      %p83 = scmp.eq.s32.totalorder %s82, 0
      %s85 = sadd.s32 %s84, 1
      %s86 = scalar_select %p83, %s84, %s85
      %p89 = pneg %p83
      %p90 = scmp.eq.s32.totalorder %s11, 1
      %p91 = por %p89, %p90
      %p92 = scmp.ne.s32.totalorder %s84, %s87
      %p93 = scmp.eq.s32.totalorder %s11, 0
      %p94 = por %p92, %p93
      %p95 = scmp.ne.s32.totalorder %s84, %s87
      %p96 = scmp.eq.s32.totalorder %s16, 1
      %p97 = por %p95, %p96
      %p98 = scmp.ne.s32.totalorder %s87, %s88
      %p99 = scmp.eq.s32.totalorder %s16, 0
      %p100 = por %p98, %p99
      %p101 = scmp.ne.s32.totalorder %s87, %s88
      %p102 = scmp.eq.s32.totalorder %s17, 1
      %p103 = por %p101, %p102
      %p105 = scmp.ne.s32.totalorder %s88, %s104
      %p106 = scmp.eq.s32.totalorder %s17, 0
      %p107 = por %p105, %p106
      %p108 = scmp.le.s32.totalorder 1, %s11
      %p109 = scmp.lt.s32.totalorder %s11, 3
      %p110 = pnand %p108, %p109
      %p111 = pneg %p110
      // Predicated region
      $region9: #{tpu_custom_call.1} parent=5 // pred_check
        _
      $region10: #{tpu_custom_call.1} parent=5 // pred_check_branch
        %113 = sbr.rel (%p110) target = $region12
      $region11: #{tpu_custom_call.1} parent=5 // pred_region
        %s114 = ssub.s32 %s11, 1
        // Predicated region
        $region13: #{tpu_custom_call.1} parent=11 // pred_check
          %p115 = pneg %p44
        $region14: #{tpu_custom_call.1} parent=11 // pred_check_branch
          %117 = sbr.rel (%p115) target = $region16
        $region15: #{tpu_custom_call.1} parent=11 // pred_region
          _
        $region16: #{tpu_custom_call.1} parent=11 // pred_fallthru
          _
      $region12: #{tpu_custom_call.1} parent=5 // pred_fallthru
        _
      %p118 = scmp.lt.s32.totalorder %s11, 2
      // Predicated region
      $region17: #{tpu_custom_call.1} parent=5 // pred_check
        %p119 = pneg %p118
      $region18: #{tpu_custom_call.1} parent=5 // pred_check_branch
        %121 = sbr.rel (%p119) target = $region20
      $region19: #{tpu_custom_call.1} parent=5 // pred_region
        // Predicated region
        $region21: #{tpu_custom_call.1} parent=19 // pred_check
          %p122 = pneg %p66
        $region22: #{tpu_custom_call.1} parent=19 // pred_check_branch
          %124 = sbr.rel (%p122) target = $region24
        $region23: #{tpu_custom_call.1} parent=19 // pred_region
          %p125 = scmp.lt.s32.totalorder %s18, 1
          %s126 = scalar_select %p125, %s18, 1
          %p127 = scmp.lt.s32.totalorder %s19, 0
          %s128 = scalar_select %p127, %s19, 0
          %s129 = smul.addr %s126, 32
          %s130 = sadd.s32 %s128, %s129
          %s131 = smul.addr %s130, 8
          %s132 = scalar_lea.vmem %s1, %s131
        $region24: #{tpu_custom_call.1} parent=19 // pred_fallthru
          _
      $region20: #{tpu_custom_call.1} parent=5 // pred_fallthru
        _
      %p133 = scmp.le.s32.totalorder 1, %s11
      %p134 = scmp.lt.s32.totalorder %s11, 3
      %p135 = pnand %p133, %p134
      %p136 = pneg %p135
      // Predicated region
      $region25: #{tpu_custom_call.1} parent=5 // pred_check
        _
      $region26: #{tpu_custom_call.1} parent=5 // pred_check_branch
        %138 = sbr.rel (%p135) target = $region28
      $region27: #{tpu_custom_call.1} parent=5 // pred_region
        %s139 = ssub.s32 %s11, 1
        %p140 = pneg %p44
        %p141 = pneg %p41
        %p142 = scmp.lt.s32.totalorder %s20, 1
        %s143 = scalar_select %p142, %s20, 1
        %p144 = scmp.lt.s32.totalorder %s21, 0
        %s145 = scalar_select %p144, %s21, 0
        %s146 = smul.addr %s143, 32
        %s147 = sadd.s32 %s145, %s146
        %s148 = smul.addr %s147, 8
        %s149 = scalar_lea.vmem %s1, %s148
        %p150 = pneg %p72
        %p151 = pneg %p69
        %p152 = pneg %p100
        %p153 = pneg %p97
        %s154 = sand.u32 %s87, 1
        %s155 = scalar_lea.sflag [#allocation3], %s154
        %s156 = sand.u32 %s87, 1
        %s157 = smul.addr %s156, 4
        %s158 = scalar_lea.vmem [#allocation2], %s157
        %p159 = scmp.lt.s32.totalorder %s20, 1
        %s160 = scalar_select %p159, %s20, 1
        %p161 = scmp.lt.s32.totalorder %s21, 0
        %s162 = scalar_select %p161, %s21, 0
        %s163 = smul.addr %s160, 32
        %s164 = sadd.s32 %s162, %s163
        %s165 = smul.addr %s164, 8
        %s166 = scalar_lea.vmem %s1, %s165
        %v167 = vld [vmem:[%s0] sm:$0xff]
        %v168 = vld [vmem:[%s166] sm:$0xff]
        %v169 = vld [vmem:[%s166 + $0x8] sm:$0xff]
        %v170 = vld [vmem:[%s166 + $0x10] sm:$0xff]
        %v171 = vld [vmem:[%s166 + $0x18] sm:$0xff]
        %v172 = vld [vmem:[%s166 + $0x20] sm:$0xff]
        %v173 = vld [vmem:[%s166 + $0x28] sm:$0xff]
        %v174 = vld [vmem:[%s166 + $0x30] sm:$0xff]
        %v175 = vld [vmem:[%s166 + $0x38] sm:$0xff]
        %v176 = vld [vmem:[%s166 + $0x40] sm:$0xff]
        %v177 = vld [vmem:[%s166 + $0x48] sm:$0xff]
        %v178 = vld [vmem:[%s166 + $0x50] sm:$0xff]
        %v179 = vld [vmem:[%s166 + $0x58] sm:$0xff]
        %v180 = vld [vmem:[%s166 + $0x60] sm:$0xff]
        %v181 = vld [vmem:[%s166 + $0x68] sm:$0xff]
        %v182 = vld [vmem:[%s166 + $0x70] sm:$0xff]
        %v183 = vld [vmem:[%s166 + $0x78] sm:$0xff]
        %v184 = vld [vmem:[%s166 + $0x80] sm:$0xff]
        %v185 = vld [vmem:[%s166 + $0x88] sm:$0xff]
        %v186 = vld [vmem:[%s166 + $0x90] sm:$0xff]
        %v187 = vld [vmem:[%s166 + $0x98] sm:$0xff]
        %v188 = vld [vmem:[%s166 + $0xa0] sm:$0xff]
        %v189 = vld [vmem:[%s166 + $0xa8] sm:$0xff]
        %v190 = vld [vmem:[%s166 + $0xb0] sm:$0xff]
        %v191 = vld [vmem:[%s166 + $0xb8] sm:$0xff]
        %v192 = vld [vmem:[%s166 + $0xc0] sm:$0xff]
        %v193 = vld [vmem:[%s166 + $0xc8] sm:$0xff]
        %v194 = vld [vmem:[%s166 + $0xd0] sm:$0xff]
        %v195 = vld [vmem:[%s166 + $0xd8] sm:$0xff]
        %v196 = vld [vmem:[%s166 + $0xe0] sm:$0xff]
        %v197 = vld [vmem:[%s166 + $0xe8] sm:$0xff]
        %v198 = vld [vmem:[%s166 + $0xf0] sm:$0xff]
        %v199 = vld [vmem:[%s166 + $0xf8] sm:$0xff]
        %v201 = vcombine.high %v167, %v167
        %203 = vmatprep.subr.mxu0 0.0
        %204 = vmatpush1.msra.mxu0 %v168
        %205 = vmatprep.subr.mxu0 0.0
        %206 = vmatpush1.msra.mxu0 %v169
        %207 = vmatprep.subr.mxu0 0.0
        %208 = vmatpush1.msra.mxu0 %v170
        %209 = vmatprep.subr.mxu0 0.0
        %210 = vmatpush1.msra.mxu0 %v171
        %211 = vmatprep.subr.mxu0 0.0
        %212 = vmatpush1.msra.mxu0 %v172
        %213 = vmatprep.subr.mxu0 0.0
        %214 = vmatpush1.msra.mxu0 %v173
        %215 = vmatprep.subr.mxu0 0.0
        %216 = vmatpush1.msra.mxu0 %v174
        %217 = vmatprep.subr.mxu0 0.0
        %218 = vmatpush1.msra.mxu0 %v175
        %219 = vmatprep.subr.mxu0 0.0
        %220 = vmatpush1.msra.mxu0 %v176
        %221 = vmatprep.subr.mxu0 0.0
        %222 = vmatpush1.msra.mxu0 %v177
        %223 = vmatprep.subr.mxu0 0.0
        %224 = vmatpush1.msra.mxu0 %v178
        %225 = vmatprep.subr.mxu0 0.0
        %226 = vmatpush1.msra.mxu0 %v179
        %227 = vmatprep.subr.mxu0 0.0
        %228 = vmatpush1.msra.mxu0 %v180
        %229 = vmatprep.subr.mxu0 0.0
        %230 = vmatpush1.msra.mxu0 %v181
        %231 = vmatprep.subr.mxu0 0.0
        %232 = vmatpush1.msra.mxu0 %v182
        %233 = vmatprep.subr.mxu0 0.0
        %234 = vmatpush1.msra.mxu0 %v183
        %235 = vmatprep.subr.mxu0 0.0
        %236 = vmatpush1.msra.mxu0 %v184
        %237 = vmatprep.subr.mxu0 0.0
        %238 = vmatpush1.msra.mxu0 %v185
        %239 = vmatprep.subr.mxu0 0.0
        %240 = vmatpush1.msra.mxu0 %v186
        %241 = vmatprep.subr.mxu0 0.0
        %242 = vmatpush1.msra.mxu0 %v187
        %243 = vmatprep.subr.mxu0 0.0
        %244 = vmatpush1.msra.mxu0 %v188
        %245 = vmatprep.subr.mxu0 0.0
        %246 = vmatpush1.msra.mxu0 %v189
        %247 = vmatprep.subr.mxu0 0.0
        %248 = vmatpush1.msra.mxu0 %v190
        %249 = vmatprep.subr.mxu0 0.0
        %250 = vmatpush1.msra.mxu0 %v191
        %251 = vmatprep.subr.mxu0 0.0
        %252 = vmatpush1.msra.mxu0 %v192
        %253 = vmatprep.subr.mxu0 0.0
        %254 = vmatpush1.msra.mxu0 %v193
        %255 = vmatprep.subr.mxu0 0.0
        %256 = vmatpush1.msra.mxu0 %v194
        %257 = vmatprep.subr.mxu0 0.0
        %258 = vmatpush1.msra.mxu0 %v195
        %259 = vmatprep.subr.mxu0 0.0
        %260 = vmatpush1.msra.mxu0 %v196
        %261 = vmatprep.subr.mxu0 0.0
        %262 = vmatpush1.msra.mxu0 %v197
        %263 = vmatprep.subr.mxu0 0.0
        %264 = vmatpush1.msra.mxu0 %v198
        %265 = vmatprep.subr.mxu0 0.0
        %266 = vmatpush1.msra.mxu0 %v199
        %267 = vmatprep.mubr.f32.mxu0 %v201
        %268 = vmatmul.mubr.f32.gmra.mrb[0].mxu0 %v167
        %v269 = vpop.f32.mrb[0].mxu0
        %v270 = vadd.f32 0.0, %v269
        %v271 = vpop.f32.mrb[0].mxu0
        %272 = vdwg.mxu0
        %vm273 = vcmask 27648
        %274 = vst.msk [vmem:[%s158] sm:$0xf] %vm273, %v270
        %s275 = sand.u32 %s87, 1
        %s276 = scalar_lea.sflag [#allocation3], %s275
        %s277 = sand.u32 %s87, 1
        %s278 = smul.addr %s277, 4
        %s279 = scalar_lea.vmem [#allocation2], %s278
        // Predicated region
        $region29: #{tpu_custom_call.1} parent=27 // pred_check
          %p280 = pneg %p97
        $region30: #{tpu_custom_call.1} parent=27 // pred_check_branch
          %282 = sbr.rel (%p280) target = $region32
        $region31: #{tpu_custom_call.1} parent=27 // pred_region
          %s284 = ssub.s32 64, 64
          %285 = vsyncadd %s276, %s284
          %s286 = sadd.s32 %s21, %s20
          %s287 = smul.addr %s286, 64
          %s288 = scalar_lea.hbm %s2, %s287
          %s290 = sshll.u32 %s279, 4
          %s291 = int_to_ptr.vmem [resolvable:$true] %s290
          %293 = dma.vmem_to_hbm [thread:$0]  %s291, 64, %s288, %s276
        $region32: #{tpu_custom_call.1} parent=27 // pred_fallthru
          _
      $region28: #{tpu_custom_call.1} parent=5 // pred_fallthru
        _
      %p294 = scmp.le.s32.totalorder 2, %s11
      // Predicated region
      $region33: #{tpu_custom_call.1} parent=5 // pred_check
        %p295 = pneg %p294
      $region34: #{tpu_custom_call.1} parent=5 // pred_check_branch
        %297 = sbr.rel (%p295) target = $region36
      $region35: #{tpu_custom_call.1} parent=5 // pred_region
        %s298 = ssub.s32 %s11, 2
        // Predicated region
        $region37: #{tpu_custom_call.1} parent=35 // pred_check
          %p299 = pneg %p103
        $region38: #{tpu_custom_call.1} parent=35 // pred_check_branch
          %301 = sbr.rel (%p299) target = $region40
        $region39: #{tpu_custom_call.1} parent=35 // pred_region
          %s302 = sand.u32 %s88, 1
          %s303 = scalar_lea.sflag [#allocation3], %s302
          %s304 = sand.u32 %s88, 1
          %s305 = smul.addr %s304, 4
          %s306 = scalar_lea.vmem [#allocation2], %s305
          %307 = dma.done %s303, 64
        $region40: #{tpu_custom_call.1} parent=35 // pred_fallthru
          _
      $region36: #{tpu_custom_call.1} parent=5 // pred_fallthru
        _
    $region6: #{tpu_custom_call.1} parent=1 // loop_footer
      %s15 = sadd.s32 1, %s11
    $region7: #{tpu_custom_call.1} parent=1 // loop_footer_branch
      %10 = sbr.rel target = $region3
    $region8: #{tpu_custom_call.1} parent=1 // loop_exit
      _
    %308 = vsyncpa [#allocation3], 1
    %s309 = scalar_lea.sflag [#allocation3], 1
    %310 = vsyncpa %s309, 1

</llo_original>
